<compile_context>
chip_gen: v6e
topology: v6e:2x2x1
jax: 0.10.0
libtpu: 0.0.40
codegen_flags: <defaults>
</compile_context>

<pallas_src>
import numpy as np

import jax
import jax.numpy as jnp
from jax import lax
from jax.experimental import pallas as pl
from jax.experimental.pallas import tpu as pltpu


# ------------------------------------------------------------------------------------
# Pallas kernel: random walks over CSR, emitting traversed (sorted) edge positions.
# ------------------------------------------------------------------------------------
def _make_walk_kernel(walk_length: int, num_edges: int):
    sentinel = num_edges          # marks "no edge traversed" (isolated node)
    inv24 = 1.0 / 16777216.0      # 2^-24

    def kernel(rowptr_ref, col_ref, start_ref, seed_ref, out_ref):
        num_starts = start_ref.shape[0]

        def walk_body(w, carry):
            seed_u = seed_ref[0].astype(jnp.uint32)
            w_u = w.astype(jnp.uint32)
            cur = start_ref[w]
            for s in range(walk_length):          # short, unrolled
                # ---- scalar hash PRNG: u ~ Uniform[0, 1) from (seed, walk, step) ----
                h = seed_u ^ (w_u * jnp.uint32(0x9E3779B1))
                h = h ^ jnp.uint32((0x85EBCA77 * (s + 1)) & 0xFFFFFFFF)
                h = h ^ lax.shift_right_logical(h, jnp.uint32(16))
                h = h * jnp.uint32(0x7FEB352D)
                h = h ^ lax.shift_right_logical(h, jnp.uint32(15))
                h = h * jnp.uint32(0x846CA68B)
                h = h ^ lax.shift_right_logical(h, jnp.uint32(16))
                u = lax.shift_right_logical(h, jnp.uint32(8)).astype(jnp.int32)
                u = u.astype(jnp.float32) * jnp.float32(inv24)

                # ---- one uniform random-walk step over the CSR ----------------------
                lo = rowptr_ref[cur]
                hi = rowptr_ref[cur + 1]
                deg = hi - lo
                off = (u * deg.astype(jnp.float32)).astype(jnp.int32)
                off = jnp.minimum(off, deg - 1)              # guard float rounding u~1
                pos = jnp.clip(lo + off, 0, num_edges - 1)   # safe read even if deg==0
                has_nbr = deg > 0
                out_ref[w * walk_length + s] = jnp.where(
                    has_nbr, pos, jnp.int32(sentinel))
                cur = jnp.where(has_nbr, col_ref[pos], cur)
            return carry

        lax.fori_loop(0, num_starts, walk_body, jnp.int32(0))

    return kernel


def _random_walk_positions(rowptr, col_sorted, starts, seed, walk_length, num_edges):
    """Run the Pallas walk kernel; returns int32 [W*walk_length] sorted-edge positions
    (value == num_edges means "no edge traversed" at that step)."""
    num_starts = int(starts.shape[0])
    kernel = _make_walk_kernel(walk_length, num_edges)
    smem = lambda: pl.BlockSpec(memory_space=pltpu.MemorySpace.SMEM)
    return pl.pallas_call(
        kernel,
        out_shape=jax.ShapeDtypeStruct((num_starts * walk_length,), jnp.int32),
        in_specs=[smem(), smem(), smem(), smem()],
        out_specs=smem(),
    )(rowptr, col_sorted, starts, seed)


# ------------------------------------------------------------------------------------
# Functional drop_path (wrapper: CSR build, root sampling, mask scatter, compaction).
# ------------------------------------------------------------------------------------
def drop_path(edge_index, edge_weight=None, *, p=0.5, walks_per_node=1, walk_length=3,
              num_nodes=None, start="node", training=True, key=None, is_sorted=False):
    """Functional drop_path. Returns (edge_index, edge_weight, keep_mask)."""
    if isinstance(p, (float, int)):
        if p < 0.0 or p > 1.0:
            raise ValueError(
                f"Sample probability has to be between 0 and 1 (got {p})")
    else:
        # TODO(synk): tensor-valued p (explicit root-node set) not implemented here.
        raise ValueError("`p` must be a float in this Pallas implementation")
    if start != "node":
        # TODO(synk): start='edge' root sampling not implemented here.
        raise ValueError("only start='node' is supported")

    num_edges = int(edge_index.shape[1])
    full_keep = jnp.ones((num_edges,), jnp.bool_)
    if (not training) or p == 0.0 or num_edges == 0 or walk_length <= 0:
        return edge_index, edge_weight, full_keep

    if num_nodes is None:
        num_nodes = int(jax.device_get(jnp.max(edge_index))) + 1
    if key is None:
        key = jax.random.PRNGKey(0)

    row = edge_index[0].astype(jnp.int32)
    col = edge_index[1].astype(jnp.int32)

    # --- CSR construction (plain-JAX glue, stays on device) --------------------------
    if is_sorted:
        perm = jnp.arange(num_edges, dtype=jnp.int32)
        col_s = col
    else:
        perm = jnp.argsort(row, stable=True).astype(jnp.int32)
        col_s = col[perm]
    deg = jnp.zeros((num_nodes,), jnp.int32).at[row].add(1)
    rowptr = jnp.concatenate(
        [jnp.zeros((1,), jnp.int32), jnp.cumsum(deg, dtype=jnp.int32)])

    # --- root sampling: randperm(num_nodes)[:round(num_nodes*p)], repeated -----------
    n_roots = int(round(num_nodes * float(p)))
    if n_roots == 0 or walks_per_node <= 0:
        return edge_index, edge_weight, full_keep
    k_roots, k_seed = jax.random.split(key)
    roots = jax.random.permutation(k_roots, num_nodes)[:n_roots].astype(jnp.int32)
    starts = jnp.tile(roots, walks_per_node)
    seed = jax.random.randint(k_seed, (1,), 0, jnp.iinfo(jnp.int32).max, jnp.int32)

    # --- Pallas kernel: random walks -> traversed sorted-edge positions --------------
    dropped_pos = _random_walk_positions(
        rowptr, col_s, starts, seed, walk_length, num_edges)

    # --- keep-mask via one gather + one scatter (sentinel lands in the pad slot) -----
    perm_ext = jnp.concatenate([perm, jnp.array([num_edges], jnp.int32)])
    dropped_eid = perm_ext[dropped_pos]
    keep = (jnp.ones((num_edges + 1,), jnp.bool_)
            .at[dropped_eid].set(False)[:num_edges])

    # --- on-device compaction (stable: kept edges keep their original order) ---------
    order = jnp.argsort(jnp.where(keep, 0, 1).astype(jnp.int32), stable=True)
    ei_c = edge_index[:, order]
    ew_c = edge_weight[order] if edge_weight is not None else None
    # Single scalar host sync only: PyTorch returns a dynamically-sized tensor, so the
    # kept-edge count is needed to pick the (static) output shape.
    n_keep = int(jax.device_get(jnp.sum(keep)))
    out_ei = ei_c[:, :n_keep]
    out_ew = ew_c[:n_keep] if ew_c is not None else None
    return out_ei, out_ew, keep


class DropPath:
    """JAX/Pallas port of greatx.nn.layers.DropPath (no learnable parameters)."""

    def __init__(self, p: float = 0.5, walks_per_node: int = 1, walk_length: int = 3,
                 num_nodes=None, start: str = "node", is_sorted: bool = False):
        self.p = p
        self.walks_per_node = walks_per_node
        self.walk_length = walk_length
        self.num_nodes = num_nodes
        self.start = start
        self.is_sorted = is_sorted
        self.training = True

    def __call__(self, edge_index, edge_weight=None, *, key=None):
        ei, ew, _ = drop_path(
            edge_index, edge_weight, p=self.p, walks_per_node=self.walks_per_node,
            walk_length=self.walk_length, num_nodes=self.num_nodes, start=self.start,
            training=self.training, key=key, is_sorted=self.is_sorted)
        return ei, ew


if __name__ == "__main__":
    key = jax.random.PRNGKey(0)

    # Small deterministic graph: 8 nodes, 16 directed edges (two outgoing per node).
    src = jnp.array([0, 0, 1, 1, 2, 2, 3, 3, 4, 4, 5, 5, 6, 6, 7, 7], jnp.int32)
    dst = jnp.array([1, 2, 2, 3, 3, 4, 4, 5, 5, 6, 6, 7, 7, 0, 0, 1], jnp.int32)
    edge_index = jnp.stack([src, dst])                        # [2, 16]
    edge_weight = jax.random.uniform(jax.random.PRNGKey(1),
                                     (edge_index.shape[1],), jnp.float32)   # [16]

    module = DropPath(p=0.5, walks_per_node=1, walk_length=3, num_nodes=8)
    out_edge_index, out_edge_weight = module(edge_index, edge_weight, key=key)
    jax.block_until_ready(out_edge_index)
    jax.block_until_ready(out_edge_weight)

    # Sanity checks: shapes line up and every kept edge existed in the input graph.
    assert out_edge_index.shape[0] == 2
    assert out_edge_index.shape[1] <= edge_index.shape[1]
    assert out_edge_weight.shape[0] == out_edge_index.shape[1]
    ei_in = np.asarray(jax.device_get(edge_index))
    ei_out = np.asarray(jax.device_get(out_edge_index))
    in_set = set(map(tuple, ei_in.T.tolist()))
    assert all(tuple(e) in in_set for e in ei_out.T.tolist())

    # keep-mask consistency through the functional API.
    _, _, keep = drop_path(edge_index, edge_weight, p=0.5, walks_per_node=1,
                           walk_length=3, num_nodes=8, key=key)
    jax.block_until_ready(keep)
    assert keep.shape == (edge_index.shape[1],)

    print("KERNEL_OK")
</pallas_src>

<mosaic_0001>
module attributes {stable_mosaic.version = 11 : i64} {
  func.func @kernel(%arg0: memref<9xi32, #tpu.memory_space<smem>>, %arg1: memref<16xi32, #tpu.memory_space<smem>>, %arg2: memref<4xi32, #tpu.memory_space<smem>>, %arg3: memref<1xi32, #tpu.memory_space<smem>>, %arg4: memref<12xi32, #tpu.memory_space<smem>>) attributes {dimension_semantics = [], scalar_prefetch = 0 : i64, scratch_operands = 0 : i64, tpu.core_type = #tpu.core_type<tc>} {
    %c0_i32 = arith.constant 0 : i32
    %c4_i32 = arith.constant 4 : i32
    %0 = arith.addi %c0_i32, %c4_i32 : i32
    %c1_i32 = arith.constant 1 : i32
    scf.for %arg5 = %c0_i32 to %0 step %c1_i32  : i32 {
      %c0 = arith.constant 0 : index
      %1 = memref.load %arg3[%c0] : memref<1xi32, #tpu.memory_space<smem>>
      %2 = arith.index_cast %arg5 : i32 to index
      %3 = memref.load %arg2[%2] : memref<4xi32, #tpu.memory_space<smem>>
      %c-1640531535_i32 = arith.constant -1640531535 : i32
      %4 = arith.muli %arg5, %c-1640531535_i32 : i32
      %5 = arith.xori %1, %4 : i32
      %c-2048144777_i32 = arith.constant -2048144777 : i32
      %6 = arith.xori %5, %c-2048144777_i32 : i32
      %c16_i32 = arith.constant 16 : i32
      %7 = arith.shrui %6, %c16_i32 : i32
      %8 = arith.xori %6, %7 : i32
      %c2146121005_i32 = arith.constant 2146121005 : i32
      %9 = arith.muli %8, %c2146121005_i32 : i32
      %c15_i32 = arith.constant 15 : i32
      %10 = arith.shrui %9, %c15_i32 : i32
      %11 = arith.xori %9, %10 : i32
      %c-2073254261_i32 = arith.constant -2073254261 : i32
      %12 = arith.muli %11, %c-2073254261_i32 : i32
      %c16_i32_1 = arith.constant 16 : i32
      %13 = arith.shrui %12, %c16_i32_1 : i32
      %14 = arith.xori %12, %13 : i32
      %c8_i32 = arith.constant 8 : i32
      %15 = arith.shrui %14, %c8_i32 : i32
      %16 = arith.sitofp %15 : i32 to f32
      %cst = arith.constant 5.96046448E-8 : f32
      %17 = arith.mulf %16, %cst : f32
      %18 = arith.index_cast %3 : i32 to index
      %19 = memref.load %arg0[%18] : memref<9xi32, #tpu.memory_space<smem>>
      %c1_i32_2 = arith.constant 1 : i32
      %20 = arith.addi %3, %c1_i32_2 : i32
      %21 = arith.index_cast %20 : i32 to index
      %22 = memref.load %arg0[%21] : memref<9xi32, #tpu.memory_space<smem>>
      %23 = arith.subi %22, %19 : i32
      %24 = arith.sitofp %23 : i32 to f32
      %25 = arith.mulf %17, %24 : f32
      %26 = arith.fptosi %25 : f32 to i32
      %c1_i32_3 = arith.constant 1 : i32
      %27 = arith.subi %23, %c1_i32_3 : i32
      %28 = arith.minsi %26, %27 : i32
      %29 = arith.addi %19, %28 : i32
      %c0_i32_4 = arith.constant 0 : i32
      %c15_i32_5 = arith.constant 15 : i32
      %30 = arith.maxsi %c0_i32_4, %29 : i32
      %31 = arith.minsi %c15_i32_5, %30 : i32
      %c0_i32_6 = arith.constant 0 : i32
      %32 = arith.cmpi sgt, %23, %c0_i32_6 : i32
      %c16_i32_7 = arith.constant 16 : i32
      %33 = arith.select %32, %31, %c16_i32_7 : i32
      %c3_i32 = arith.constant 3 : i32
      %34 = arith.muli %arg5, %c3_i32 : i32
      %c0_i32_8 = arith.constant 0 : i32
      %35 = arith.addi %34, %c0_i32_8 : i32
      %36 = arith.index_cast %35 : i32 to index
      %37 = memref.load %arg4[%36] : memref<12xi32, #tpu.memory_space<smem>>
      memref.store %33, %arg4[%36] : memref<12xi32, #tpu.memory_space<smem>>
      %38 = arith.index_cast %31 : i32 to index
      %39 = memref.load %arg1[%38] : memref<16xi32, #tpu.memory_space<smem>>
      %40 = arith.select %32, %39, %3 : i32
      %c-1640531535_i32_9 = arith.constant -1640531535 : i32
      %41 = arith.muli %arg5, %c-1640531535_i32_9 : i32
      %42 = arith.xori %1, %41 : i32
      %c198677742_i32 = arith.constant 198677742 : i32
      %43 = arith.xori %42, %c198677742_i32 : i32
      %c16_i32_10 = arith.constant 16 : i32
      %44 = arith.shrui %43, %c16_i32_10 : i32
      %45 = arith.xori %43, %44 : i32
      %c2146121005_i32_11 = arith.constant 2146121005 : i32
      %46 = arith.muli %45, %c2146121005_i32_11 : i32
      %c15_i32_12 = arith.constant 15 : i32
      %47 = arith.shrui %46, %c15_i32_12 : i32
      %48 = arith.xori %46, %47 : i32
      %c-2073254261_i32_13 = arith.constant -2073254261 : i32
      %49 = arith.muli %48, %c-2073254261_i32_13 : i32
      %c16_i32_14 = arith.constant 16 : i32
      %50 = arith.shrui %49, %c16_i32_14 : i32
      %51 = arith.xori %49, %50 : i32
      %c8_i32_15 = arith.constant 8 : i32
      %52 = arith.shrui %51, %c8_i32_15 : i32
      %53 = arith.sitofp %52 : i32 to f32
      %cst_16 = arith.constant 5.96046448E-8 : f32
      %54 = arith.mulf %53, %cst_16 : f32
      %55 = arith.index_cast %40 : i32 to index
      %56 = memref.load %arg0[%55] : memref<9xi32, #tpu.memory_space<smem>>
      %c1_i32_17 = arith.constant 1 : i32
      %57 = arith.addi %40, %c1_i32_17 : i32
      %58 = arith.index_cast %57 : i32 to index
      %59 = memref.load %arg0[%58] : memref<9xi32, #tpu.memory_space<smem>>
      %60 = arith.subi %59, %56 : i32
      %61 = arith.sitofp %60 : i32 to f32
      %62 = arith.mulf %54, %61 : f32
      %63 = arith.fptosi %62 : f32 to i32
      %c1_i32_18 = arith.constant 1 : i32
      %64 = arith.subi %60, %c1_i32_18 : i32
      %65 = arith.minsi %63, %64 : i32
      %66 = arith.addi %56, %65 : i32
      %c0_i32_19 = arith.constant 0 : i32
      %c15_i32_20 = arith.constant 15 : i32
      %67 = arith.maxsi %c0_i32_19, %66 : i32
      %68 = arith.minsi %c15_i32_20, %67 : i32
      %c0_i32_21 = arith.constant 0 : i32
      %69 = arith.cmpi sgt, %60, %c0_i32_21 : i32
      %c16_i32_22 = arith.constant 16 : i32
      %70 = arith.select %69, %68, %c16_i32_22 : i32
      %c3_i32_23 = arith.constant 3 : i32
      %71 = arith.muli %arg5, %c3_i32_23 : i32
      %c1_i32_24 = arith.constant 1 : i32
      %72 = arith.addi %71, %c1_i32_24 : i32
      %73 = arith.index_cast %72 : i32 to index
      %74 = memref.load %arg4[%73] : memref<12xi32, #tpu.memory_space<smem>>
      memref.store %70, %arg4[%73] : memref<12xi32, #tpu.memory_space<smem>>
      %75 = arith.index_cast %68 : i32 to index
      %76 = memref.load %arg1[%75] : memref<16xi32, #tpu.memory_space<smem>>
      %77 = arith.select %69, %76, %40 : i32
      %c-1640531535_i32_25 = arith.constant -1640531535 : i32
      %78 = arith.muli %arg5, %c-1640531535_i32_25 : i32
      %79 = arith.xori %1, %78 : i32
      %c-1849467035_i32 = arith.constant -1849467035 : i32
      %80 = arith.xori %79, %c-1849467035_i32 : i32
      %c16_i32_26 = arith.constant 16 : i32
      %81 = arith.shrui %80, %c16_i32_26 : i32
      %82 = arith.xori %80, %81 : i32
      %c2146121005_i32_27 = arith.constant 2146121005 : i32
      %83 = arith.muli %82, %c2146121005_i32_27 : i32
      %c15_i32_28 = arith.constant 15 : i32
      %84 = arith.shrui %83, %c15_i32_28 : i32
      %85 = arith.xori %83, %84 : i32
      %c-2073254261_i32_29 = arith.constant -2073254261 : i32
      %86 = arith.muli %85, %c-2073254261_i32_29 : i32
      %c16_i32_30 = arith.constant 16 : i32
      %87 = arith.shrui %86, %c16_i32_30 : i32
      %88 = arith.xori %86, %87 : i32
      %c8_i32_31 = arith.constant 8 : i32
      %89 = arith.shrui %88, %c8_i32_31 : i32
      %90 = arith.sitofp %89 : i32 to f32
      %cst_32 = arith.constant 5.96046448E-8 : f32
      %91 = arith.mulf %90, %cst_32 : f32
      %92 = arith.index_cast %77 : i32 to index
      %93 = memref.load %arg0[%92] : memref<9xi32, #tpu.memory_space<smem>>
      %c1_i32_33 = arith.constant 1 : i32
      %94 = arith.addi %77, %c1_i32_33 : i32
      %95 = arith.index_cast %94 : i32 to index
      %96 = memref.load %arg0[%95] : memref<9xi32, #tpu.memory_space<smem>>
      %97 = arith.subi %96, %93 : i32
      %98 = arith.sitofp %97 : i32 to f32
      %99 = arith.mulf %91, %98 : f32
      %100 = arith.fptosi %99 : f32 to i32
      %c1_i32_34 = arith.constant 1 : i32
      %101 = arith.subi %97, %c1_i32_34 : i32
      %102 = arith.minsi %100, %101 : i32
      %103 = arith.addi %93, %102 : i32
      %c0_i32_35 = arith.constant 0 : i32
      %c15_i32_36 = arith.constant 15 : i32
      %104 = arith.maxsi %c0_i32_35, %103 : i32
      %105 = arith.minsi %c15_i32_36, %104 : i32
      %c0_i32_37 = arith.constant 0 : i32
      %106 = arith.cmpi sgt, %97, %c0_i32_37 : i32
      %c16_i32_38 = arith.constant 16 : i32
      %107 = arith.select %106, %105, %c16_i32_38 : i32
      %c3_i32_39 = arith.constant 3 : i32
      %108 = arith.muli %arg5, %c3_i32_39 : i32
      %c2_i32 = arith.constant 2 : i32
      %109 = arith.addi %108, %c2_i32 : i32
      %110 = arith.index_cast %109 : i32 to index
      %111 = memref.load %arg4[%110] : memref<12xi32, #tpu.memory_space<smem>>
      memref.store %107, %arg4[%110] : memref<12xi32, #tpu.memory_space<smem>>
    }
    %c4_i32_0 = arith.constant 4 : i32
    return
  }
}

</mosaic_0001>

<llo_original>
// kernel: tpu_custom_call.1
$region0: #{tpu_custom_call.1}
  #allocation0 [shape = 'u32[]', space=smem, size = 0x4, offset = 0x4, fixed_abs, tag = 'smem constant byte address 0x4 - core index']
  #allocation1 [shape = 'u32[144,128]{1,0:T(1,128)}', space=vmem, size = 0x12000, scoped, tag = 'internal scratch']
  #allocation2 [shape = 's32[1]{0:T(128)S(6)}', space=smem, size = 0x200, scoped, tag = 'scoped memory for tpu_custom_call.1']
  %s0 = inlined_call_operand.vmem [shape: s32[9], index: 0, kind: input, shape index: {}]
  %s1 = inlined_call_operand.vmem [shape: s32[16], index: 1, kind: input, shape index: {}]
  %s2 = inlined_call_operand.vmem [shape: s32[4], index: 2, kind: input, shape index: {}]
  %s3 = inlined_call_operand.<no memory space> [shape: s32[1], index: 3, kind: input, shape index: {}]
  %s4 = inlined_call_operand.hbm [shape: s32[12], index: 4, kind: output, shape index: {}]
  %s5 = sld [smem:[#allocation0]]
  $region45: #{tpu_custom_call.1} parent=0
    _
  %s7 = ssub.s32 1, %s5
  %s8 = scalar_select 0, %s7, %s5
  %9 = sst [smem:[#allocation2]] %s3
  $region1: #{tpu_custom_call.1} parent=0
    #allocation3 [shape = 'u8[512]{0}', space=smem, size = 0x200, scoped, tag = 'input window, operand 0, single buffered']
    #allocation4 [shape = 's32[1]{0}', space=sflag, size = 0x4, scoped, tag = 'scoped memory for tpu_custom_call.1']
    #allocation5 [shape = 's32[1]{0}', space=sflag, size = 0x4, scoped, tag = 'scoped memory for tpu_custom_call.1']
    #allocation6 [shape = 'u8[512]{0}', space=smem, size = 0x200, scoped, tag = 'input window, operand 1, single buffered']
    #allocation7 [shape = 's32[1]{0}', space=sflag, size = 0x4, scoped, tag = 'scoped memory for tpu_custom_call.1']
    #allocation8 [shape = 'u8[512]{0}', space=smem, size = 0x200, scoped, tag = 'input window, operand 2, single buffered']
    #allocation9 [shape = 'u8[512]{0}', space=smem, size = 0x200, scoped, tag = 'output window, operand 0, single buffered']
    %10 = vsyncpa [#allocation5], 0
    %11 = vsyncpa [#allocation7], 0
    %12 = vsyncpa [#allocation4], 0
    // Predicated region
    $region2: #{tpu_custom_call.1} parent=1 // pred_check
      _
    $region3: #{tpu_custom_call.1} parent=1 // pred_check_branch
      %14 = sbr.rel (0) target = $region5
    $region4: #{tpu_custom_call.1} parent=1 // pred_region
      %s16 = ssub.s32 16, 16
      %17 = vsyncadd [#allocation5], %s16
      %s19 = sshll.u32 %s0, 4
      %s20 = int_to_ptr.vmem [resolvable:$true] %s19
      %22 = dma.vmem_to_smem %s20, 16, [#allocation3], [#allocation5]
    $region5: #{tpu_custom_call.1} parent=1 // pred_fallthru
      _
    // Predicated region
    $region6: #{tpu_custom_call.1} parent=1 // pred_check
      _
    $region7: #{tpu_custom_call.1} parent=1 // pred_check_branch
      %24 = sbr.rel (0) target = $region9
    $region8: #{tpu_custom_call.1} parent=1 // pred_region
      %s26 = ssub.s32 16, 16
      %27 = vsyncadd [#allocation7], %s26
      %s29 = sshll.u32 %s1, 4
      %s30 = int_to_ptr.vmem [resolvable:$true] %s29
      %32 = dma.vmem_to_smem %s30, 16, [#allocation6], [#allocation7]
    $region9: #{tpu_custom_call.1} parent=1 // pred_fallthru
      _
    // Predicated region
    $region10: #{tpu_custom_call.1} parent=1 // pred_check
      _
    $region11: #{tpu_custom_call.1} parent=1 // pred_check_branch
      %34 = sbr.rel (0) target = $region13
    $region12: #{tpu_custom_call.1} parent=1 // pred_region
      %s36 = ssub.s32 16, 16
      %37 = vsyncadd [#allocation7], %s36
      %s39 = sshll.u32 %s2, 4
      %s40 = int_to_ptr.vmem [resolvable:$true] %s39
      %42 = dma.vmem_to_smem %s40, 16, [#allocation8], [#allocation7]
    $region13: #{tpu_custom_call.1} parent=1 // pred_fallthru
      _
    // Predicated region
    $region14: #{tpu_custom_call.1} parent=1 // pred_check
      _
    $region15: #{tpu_custom_call.1} parent=1 // pred_check_branch
      %44 = sbr.rel (0) target = $region17
    $region16: #{tpu_custom_call.1} parent=1 // pred_region
      _
    $region17: #{tpu_custom_call.1} parent=1 // pred_fallthru
      _
    // Predicated region
    $region18: #{tpu_custom_call.1} parent=1 // pred_check
      _
    $region19: #{tpu_custom_call.1} parent=1 // pred_check_branch
      %46 = sbr.rel (0) target = $region21
    $region20: #{tpu_custom_call.1} parent=1 // pred_region
      %47 = dma.done [#allocation5], 16
    $region21: #{tpu_custom_call.1} parent=1 // pred_fallthru
      _
    // Predicated region
    $region22: #{tpu_custom_call.1} parent=1 // pred_check
      _
    $region23: #{tpu_custom_call.1} parent=1 // pred_check_branch
      %49 = sbr.rel (0) target = $region25
    $region24: #{tpu_custom_call.1} parent=1 // pred_region
      %50 = dma.done [#allocation7], 16
    $region25: #{tpu_custom_call.1} parent=1 // pred_fallthru
      _
    // Predicated region
    $region26: #{tpu_custom_call.1} parent=1 // pred_check
      _
    $region27: #{tpu_custom_call.1} parent=1 // pred_check_branch
      %52 = sbr.rel (0) target = $region29
    $region28: #{tpu_custom_call.1} parent=1 // pred_region
      %53 = dma.done [#allocation7], 16
    $region29: #{tpu_custom_call.1} parent=1 // pred_fallthru
      _
    %54 = sfence
    loop: start=0, step=1, limit=4
    $region30: #{tpu_custom_call.1} parent=1 // loop_pre_header
      _
    $region31: #{tpu_custom_call.1} parent=1 // loop_header
      %s56 = sphi 0, %s60
      %p57 = scmp.ge.s32.totalorder %s56, 4
    $region32: #{tpu_custom_call.1} parent=1 // loop_header_branch
      %59 = sbr.rel (%p57) target = $region36
    $region33: #{tpu_custom_call.1} parent=1 // loop_body
      %s61 = sld [smem:[#allocation2]]
      %s62 = sld [smem:[#allocation8 + %s56]]
      %s63 = smul.u32 %s56, 2654435761
      %s64 = sxor.u32 %s61, %s63
      %s65 = sxor.u32 %s64, 2246822519
      %s66 = sshrl.u32 %s65, 16
      %s67 = sxor.u32 %s65, %s66
      %s68 = smul.u32 %s67, 2146121005
      %s69 = sshrl.u32 %s68, 15
      %s70 = sxor.u32 %s68, %s69
      %s71 = smul.u32 %s70, 2221713035
      %s72 = sshrl.u32 %s71, 16
      %s73 = sxor.u32 %s71, %s72
      %s74 = sshrl.u32 %s73, 8
      %s75 = scvt.s32.f32 %s74
      %s76 = smul.f32 %s75, 5.9604645e-08
      %s77 = sld [smem:[#allocation3 + %s62]]
      %s78 = sadd.s32 %s62, 1
      %s79 = sld [smem:[#allocation3 + %s78]]
      %s80 = ssub.s32 %s79, %s77
      %s81 = scvt.s32.f32 %s80
      %s82 = smul.f32 %s76, %s81
      %s83 = scvt.f32.s32.to.zero.pseudo %s82
      %s84 = ssub.s32 %s80, 1
      %p85 = scmp.lt.s32.totalorder %s83, %s84
      %s86 = scalar_select %p85, %s83, %s84
      %s87 = sadd.s32 %s77, %s86
      %p88 = scmp.gt.s32.totalorder %s87, 0
      %s89 = scalar_select %p88, %s87, 0
      %p90 = scmp.lt.s32.totalorder %s89, 15
      %s91 = scalar_select %p90, %s89, 15
      %p92 = scmp.gt.s32.totalorder %s80, 0
      %s93 = scalar_select %p92, %s91, 16
      %s94 = smul.u32 %s56, 3
      %s95 = scalar_lea.smem [#allocation9], %s94
      %96 = sst [smem:[%s95]] %s93
      %s97 = sld [smem:[#allocation6 + %s91]]
      %s98 = scalar_select %p92, %s97, %s62
      %s99 = sxor.u32 %s64, 198677742
      %s100 = sshrl.u32 %s99, 16
      %s101 = sxor.u32 %s99, %s100
      %s102 = smul.u32 %s101, 2146121005
      %s103 = sshrl.u32 %s102, 15
      %s104 = sxor.u32 %s102, %s103
      %s105 = smul.u32 %s104, 2221713035
      %s106 = sshrl.u32 %s105, 16
      %s107 = sxor.u32 %s105, %s106
      %s108 = sshrl.u32 %s107, 8
      %s109 = scvt.s32.f32 %s108
      %s110 = smul.f32 %s109, 5.9604645e-08
      %s111 = sld [smem:[#allocation3 + %s98]]
      %s112 = sadd.s32 %s98, 1
      %s113 = sld [smem:[#allocation3 + %s112]]
      %s114 = ssub.s32 %s113, %s111
      %s115 = scvt.s32.f32 %s114
      %s116 = smul.f32 %s110, %s115
      %s117 = scvt.f32.s32.to.zero.pseudo %s116
      %s118 = ssub.s32 %s114, 1
      %p119 = scmp.lt.s32.totalorder %s117, %s118
      %s120 = scalar_select %p119, %s117, %s118
      %s121 = sadd.s32 %s111, %s120
      %p122 = scmp.gt.s32.totalorder %s121, 0
      %s123 = scalar_select %p122, %s121, 0
      %p124 = scmp.lt.s32.totalorder %s123, 15
      %s125 = scalar_select %p124, %s123, 15
      %p126 = scmp.gt.s32.totalorder %s114, 0
      %s127 = scalar_select %p126, %s125, 16
      %s128 = sadd.s32 %s94, 1
      %s129 = scalar_lea.smem [#allocation9], %s128
      %130 = sst [smem:[%s129]] %s127
      %s131 = sld [smem:[#allocation6 + %s125]]
      %s132 = scalar_select %p126, %s131, %s98
      %s133 = sxor.u32 %s64, 2445500261
      %s134 = sshrl.u32 %s133, 16
      %s135 = sxor.u32 %s133, %s134
      %s136 = smul.u32 %s135, 2146121005
      %s137 = sshrl.u32 %s136, 15
      %s138 = sxor.u32 %s136, %s137
      %s139 = smul.u32 %s138, 2221713035
      %s140 = sshrl.u32 %s139, 16
      %s141 = sxor.u32 %s139, %s140
      %s142 = sshrl.u32 %s141, 8
      %s143 = scvt.s32.f32 %s142
      %s144 = smul.f32 %s143, 5.9604645e-08
      %s145 = sld [smem:[#allocation3 + %s132]]
      %s146 = sadd.s32 %s132, 1
      %s147 = sld [smem:[#allocation3 + %s146]]
      %s148 = ssub.s32 %s147, %s145
      %s149 = scvt.s32.f32 %s148
      %s150 = smul.f32 %s144, %s149
      %s151 = scvt.f32.s32.to.zero.pseudo %s150
      %s152 = ssub.s32 %s148, 1
      %p153 = scmp.lt.s32.totalorder %s151, %s152
      %s154 = scalar_select %p153, %s151, %s152
      %s155 = sadd.s32 %s145, %s154
      %p156 = scmp.gt.s32.totalorder %s155, 0
      %s157 = scalar_select %p156, %s155, 0
      %p158 = scmp.lt.s32.totalorder %s157, 15
      %s159 = scalar_select %p158, %s157, 15
      %p160 = scmp.gt.s32.totalorder %s148, 0
      %s161 = scalar_select %p160, %s159, 16
      %s162 = sadd.s32 %s94, 2
      %s163 = scalar_lea.smem [#allocation9], %s162
      %164 = sst [smem:[%s163]] %s161
    $region34: #{tpu_custom_call.1} parent=1 // loop_footer
      %s60 = sadd.s32 1, %s56
    $region35: #{tpu_custom_call.1} parent=1 // loop_footer_branch
      %55 = sbr.rel target = $region31
    $region36: #{tpu_custom_call.1} parent=1 // loop_exit
      _
    // Predicated region
    $region37: #{tpu_custom_call.1} parent=1 // pred_check
      _
    $region38: #{tpu_custom_call.1} parent=1 // pred_check_branch
      %166 = sbr.rel (0) target = $region40
    $region39: #{tpu_custom_call.1} parent=1 // pred_region
      %s168 = ssub.s32 16, 16
      %169 = vsyncadd [#allocation4], %s168
      %172 = dma.smem_to_hbm [#allocation9], 16, %s4, [#allocation4]
    $region40: #{tpu_custom_call.1} parent=1 // pred_fallthru
      _
    // Predicated region
    $region41: #{tpu_custom_call.1} parent=1 // pred_check
      _
    $region42: #{tpu_custom_call.1} parent=1 // pred_check_branch
      %174 = sbr.rel (0) target = $region44
    $region43: #{tpu_custom_call.1} parent=1 // pred_region
      %175 = dma.done [#allocation4], 16
    $region44: #{tpu_custom_call.1} parent=1 // pred_fallthru
      _
    %176 = sfence
    %177 = vsyncpa [#allocation4], 1
    %178 = vsyncpa [#allocation5], 1
    %179 = vsyncpa [#allocation7], 1

</llo_original>
